<compile_context>
chip_gen: v5e
topology: v5e:2x2
jax: 0.10.0
libtpu: 0.0.40
codegen_flags: <defaults>
</compile_context>

<pallas_src>
import functools

import jax
import jax.numpy as jnp
from jax import lax
from jax.experimental import pallas as pl
from jax.experimental.pallas import tpu as pltpu


def _round_up(x, m):
    return (x + m - 1) // m * m


def _vmem_limits():
    """Per-generation (vmem_limit_bytes, tiling budget) in bytes."""
    try:
        cap = pltpu.get_tpu_info().vmem_capacity_bytes
    except Exception:                      # conservative (v7x-sized) default
        cap = 64 * 1024 * 1024
    limit = min((cap * 3) // 4, 112 * 1024 * 1024)   # ~48 MiB v7x, ~96 MiB v5e/v6e
    budget = (limit * 3) // 4                        # ~36 MiB v7x, ~72 MiB v5e/v6e
    return limit, budget


def _choose_tile_d(d_pad):
    """Feature-column tile: full D when small, else a 128-multiple divisor."""
    if d_pad <= 512:
        return d_pad
    for dt in (512, 384, 256, 128):
        if d_pad % dt == 0:
            return dt
    return d_pad  # unreachable: d_pad is a multiple of 128


def _choose_tile_n(n, d_pad, d_tile, c_pad, budget):
    """Largest layout-friendly batch tile whose working set fits the budget."""
    per_row_1 = 16 * d_tile + 8 * c_pad   # phase 1: feat double-buf + squares + onehot
    fixed_1 = 16 * c_pad * d_tile         # phase 1: s1/s2 accumulators + std out bufs
    per_row_2 = 12 * d_pad + 8 * c_pad    # phase 2: out double-buf + onehot
    fixed_2 = 4 * c_pad * d_pad           # phase 2: resident std table (single copy)

    def fits(tn):
        return (fixed_1 + tn * per_row_1 <= budget and
                fixed_2 + tn * per_row_2 <= budget)

    n8 = _round_up(max(n, 1), 8)
    if n8 <= 2048 and fits(n8):
        return n8                           # single tile: block dims == array dims
    for tn in (2048, 1024, 512, 256, 128):  # multiples of 128 keep BlockSpecs legal
        if fits(tn):
            return tn
    return 128  # TODO(synk): also tile the feature dim in phase 2 for extreme C*D


def _stats_kernel(labels_ref, feat_ref, std_ref, s1_acc, s2_acc, cnt_acc,
                  *, s1_native_dtype):
    ni = pl.program_id(1)
    c_pad = s1_acc.shape[0]
    tn = labels_ref.shape[1]

    @pl.when(ni == 0)
    def _init():
        s1_acc[...] = jnp.zeros_like(s1_acc)
        s2_acc[...] = jnp.zeros_like(s2_acc)
        cnt_acc[...] = jnp.zeros_like(cnt_acc)

    labels = labels_ref[...]                                      # (1, TN) int32
    # Transposed one-hot (C_pad, TN): labels broadcast along sublanes, lane-dense.
    # Padded batch rows carry label == class_num -> dead class row, no mask needed.
    class_iota = lax.broadcasted_iota(jnp.int32, (c_pad, tn), 0)
    onehot_t = jnp.where(labels == class_iota, 1.0, 0.0)          # (C_pad, TN) f32

    # Per-class counts: cross-lane reduce (XLU slot). f32 counts are exact <2^24.
    cnt_acc[...] += jnp.sum(onehot_t, axis=1, keepdims=True)      # (C_pad, 1)

    feat = feat_ref[...]                                          # (TN, d_tile)
    if s1_native_dtype:
        # bf16 features: one-hot & features are exact in bf16 -> native MXU rate,
        # f32 accumulation via preferred_element_type.
        s1_acc[...] += jnp.dot(onehot_t.astype(feat.dtype), feat,
                               preferred_element_type=jnp.float32)
    else:
        s1_acc[...] += jnp.dot(onehot_t, feat.astype(jnp.float32),
                               preferred_element_type=jnp.float32)
    # Keep the second-moment path in f32 (bf16 x*x loses bits / can overflow).
    feat_f32 = feat.astype(jnp.float32)
    s2_acc[...] += jnp.dot(onehot_t, feat_f32 * feat_f32,
                           preferred_element_type=jnp.float32)

    @pl.when(ni == pl.num_programs(1) - 1)
    def _finalize():
        count = cnt_acc[...]                                      # (C_pad, 1)
        amount = jnp.where(count == 0.0, 1.0, count)
        s1 = s1_acc[...]
        mean = s1 / amount
        # sum_n onehot*(x-mean)^2 = S2 - mean*S1   (since count*mean == S1)
        # TODO(synk): the moment identity can cancel when |mean| >> std; a two-pass
        # (centered) accumulation would be more robust for such data.
        var = (s2_acc[...] - mean * s1) / amount
        std_ref[...] = jnp.sqrt(jnp.maximum(var, 0.0))


def _gather_matmul_kernel(labels_ref, std_ref, out_ref):
    # labels_ref: (TN, 1) int32 block; std_ref: (C_pad, D_pad) f32 resident in VMEM.
    tn = labels_ref.shape[0]
    c_pad = std_ref.shape[0]
    labels = labels_ref[...]                                      # (TN, 1)
    class_iota = lax.broadcasted_iota(jnp.int32, (tn, c_pad), 1)
    onehot = jnp.where(labels == class_iota, 1.0, 0.0)            # (TN, C_pad) f32
    # Row gather as a small MXU matmul -> full-tile, lane-dense, unmasked stores.
    out_ref[...] = jnp.dot(onehot, std_ref[...],
                           preferred_element_type=jnp.float32)


def _gather_rowcopy_kernel(labels_ref, std_ref, out_ref, *, tile_n):
    # Fallback for very large class counts (one-hot matmul FLOPs would dominate).
    # labels_ref: (N_pad,) int32 in SMEM (scalar prefetch)
    # std_ref:    (C_pad, D_pad) f32, resident in VMEM (single copy)
    # out_ref:    (TN, D_pad) f32 output tile
    base = pl.program_id(0) * tile_n

    def body(s, carry):
        r0 = pl.multiple_of(s * 8, 8)        # 8-row unroll: aligned store groups
        for u in range(8):
            r = r0 + u
            lbl = labels_ref[base + r]
            out_ref[pl.ds(r, 1), :] = std_ref[pl.ds(lbl, 1), :]
        return carry

    lax.fori_loop(0, tile_n // 8, body, 0)
    # TODO(synk): for C*D too large to hold the std table resident in VMEM,
    # stream rows from HBM with manual make_async_copy instead.


def estimator_cv(features, labels, class_num):
    N, D = features.shape
    c_pad = _round_up(class_num + 1, 8)   # +1: dead class row absorbs padded rows
    d_pad = _round_up(D, 128)
    d_tile = _choose_tile_d(d_pad)
    vmem_limit, vmem_budget = _vmem_limits()
    tn = _choose_tile_n(N, d_pad, d_tile, c_pad, vmem_budget)
    n_pad = _round_up(N, tn)
    n_tiles = n_pad // tn
    d_tiles = d_pad // d_tile

    # Pad only when needed (aligned shapes skip a full HBM read+write of features).
    if n_pad != N or d_pad != D:
        feats_pad = jnp.pad(features, ((0, n_pad - N), (0, d_pad - D)))
    else:
        feats_pad = features
    labels_i32 = labels.astype(jnp.int32)
    if n_pad != N:
        # Padded batch rows fall into the dead class row -> no per-step mask.
        labels_i32 = jnp.pad(labels_i32, (0, n_pad - N), constant_values=class_num)
    labels_row = labels_i32.reshape(1, n_pad)
    labels_col = labels_i32.reshape(n_pad, 1)

    # ---- Phase 1: per-class std table (C_pad, D_pad) ----
    std_table = pl.pallas_call(
        functools.partial(_stats_kernel,
                          s1_native_dtype=(features.dtype == jnp.bfloat16)),
        out_shape=jax.ShapeDtypeStruct((c_pad, d_pad), jnp.float32),
        grid=(d_tiles, n_tiles),
        in_specs=[
            pl.BlockSpec((1, tn), lambda di, ni: (0, ni)),         # labels tile
            pl.BlockSpec((tn, d_tile), lambda di, ni: (ni, di)),   # feature tile
        ],
        out_specs=pl.BlockSpec((c_pad, d_tile), lambda di, ni: (0, di)),
        scratch_shapes=[
            pltpu.VMEM((c_pad, d_tile), jnp.float32),   # sum(x) accumulator
            pltpu.VMEM((c_pad, d_tile), jnp.float32),   # sum(x*x) accumulator
            pltpu.VMEM((c_pad, 1), jnp.float32),        # per-class counts
        ],
        compiler_params=pltpu.CompilerParams(
            dimension_semantics=("parallel", "arbitrary"),
            vmem_limit_bytes=vmem_limit,
        ),
    )(labels_row, feats_pad)

    # ---- Phase 2: gather std[labels] back per sample ----
    if c_pad <= 4096:
        # One-hot MXU gather: full-tile lane-dense stores (HBM-write roofline).
        out_pad = pl.pallas_call(
            _gather_matmul_kernel,
            out_shape=jax.ShapeDtypeStruct((n_pad, d_pad), jnp.float32),
            grid=(n_tiles,),
            in_specs=[
                pl.BlockSpec((tn, 1), lambda i: (i, 0)),             # labels column
                pl.BlockSpec(memory_space=pltpu.MemorySpace.VMEM),   # std table, 1 copy
            ],
            out_specs=pl.BlockSpec((tn, d_pad), lambda i: (i, 0)),
            compiler_params=pltpu.CompilerParams(
                dimension_semantics=("parallel",),
                vmem_limit_bytes=vmem_limit,
            ),
        )(labels_col, std_table)
    else:
        # Very large C: 8-row-unrolled dynamic row copy, labels prefetched to SMEM.
        out_pad = pl.pallas_call(
            functools.partial(_gather_rowcopy_kernel, tile_n=tn),
            out_shape=jax.ShapeDtypeStruct((n_pad, d_pad), jnp.float32),
            grid_spec=pltpu.PrefetchScalarGridSpec(
                num_scalar_prefetch=1,
                grid=(n_tiles,),
                in_specs=[pl.BlockSpec(memory_space=pltpu.MemorySpace.VMEM)],
                out_specs=pl.BlockSpec((tn, d_pad), lambda i, lbl: (i, 0)),
            ),
            compiler_params=pltpu.CompilerParams(
                dimension_semantics=("parallel",),
                vmem_limit_bytes=vmem_limit,
            ),
        )(labels_i32, std_table)

    return out_pad[:N, :D]


def estimator_cv_ref(features, labels, class_num):
    """Pure-JAX reference mirroring the PyTorch code line-by-line."""
    N, D = features.shape
    C = class_num
    onehot = jax.nn.one_hot(labels, C, dtype=jnp.float32)            # (N, C)
    bco = jnp.broadcast_to(onehot[:, :, None], (N, C, D))            # (N, C, D)
    amount = bco.sum(0)
    amount = jnp.where(amount == 0, 1.0, amount)
    bcf = jnp.broadcast_to(features[:, None, :].astype(jnp.float32), (N, C, D))
    ext = bcf * bco
    ave = ext.sum(0) / amount
    var = ext - ave[None] * bco
    var = (var ** 2).sum(0) / amount
    std = jnp.sqrt(var)
    return std[labels]


if __name__ == "__main__":
    N, C, D = 8, 4, 32   # batch, class_num, feature_dim
    key = jax.random.PRNGKey(0)
    kf, kl = jax.random.split(key)
    features = jax.random.normal(kf, (N, D), dtype=jnp.float32)
    labels = jax.random.randint(kl, (N,), 0, C, dtype=jnp.int32)

    out = estimator_cv(features, labels, C)
    out = jax.block_until_ready(out)

    ref = estimator_cv_ref(features, labels, C)
    assert out.shape == (N, D) and out.dtype == jnp.float32
    assert jnp.allclose(out, ref, atol=1e-5, rtol=1e-5), "mismatch vs reference"

    print("KERNEL_OK")
</pallas_src>

<mosaic_0001>
module attributes {stable_mosaic.version = 11 : i64} {
  func.func @_stats_kernel(%arg0: i32, %arg1: i32, %arg2: memref<1x8xi32, #tpu.memory_space<vmem>>, %arg3: memref<8x128xf32, #tpu.memory_space<vmem>>, %arg4: memref<8x128xf32, #tpu.memory_space<vmem>>, %arg5: memref<8x128xf32, #tpu.memory_space<vmem>>, %arg6: memref<8x128xf32, #tpu.memory_space<vmem>>, %arg7: memref<8x1xf32, #tpu.memory_space<vmem>>) attributes {dimension_semantics = [#tpu.dimension_semantics<parallel>, #tpu.dimension_semantics<arbitrary>], iteration_bounds = array<i64: 1, 1>, scalar_prefetch = 0 : i64, scratch_operands = 3 : i64, tpu.core_type = #tpu.core_type<tc>, window_params = [{transform_indices = @transform_0, window_bounds = array<i64: 1, 8>}, {transform_indices = @transform_1, window_bounds = array<i64: 8, 128>}, {transform_indices = @transform_2, window_bounds = array<i64: 8, 128>}]} {
    %c0_i32 = arith.constant 0 : i32
    %0 = arith.cmpi eq, %arg1, %c0_i32 : i32
    %1 = arith.extui %0 : i1 to i32
    %c0_i32_0 = arith.constant 0 : i32
    %2 = arith.cmpi ne, %1, %c0_i32_0 : i32
    scf.if %2 {
      %cst_22 = arith.constant 0.000000e+00 : f32
      %28 = vector.broadcast %cst_22 : f32 to vector<8x128xf32>
      %c0_23 = arith.constant 0 : index
      %c0_24 = arith.constant 0 : index
      %29 = vector.load %arg5[%c0_23, %c0_24] : memref<8x128xf32, #tpu.memory_space<vmem>>, vector<8x128xf32>
      tpu.vector_store %arg5[%c0_23, %c0_24], %28 {strides = array<i32>} : memref<8x128xf32, #tpu.memory_space<vmem>>, vector<8x128xf32>,
      %cst_25 = arith.constant 0.000000e+00 : f32
      %30 = vector.broadcast %cst_25 : f32 to vector<8x128xf32>
      %c0_26 = arith.constant 0 : index
      %c0_27 = arith.constant 0 : index
      %31 = vector.load %arg6[%c0_26, %c0_27] : memref<8x128xf32, #tpu.memory_space<vmem>>, vector<8x128xf32>
      tpu.vector_store %arg6[%c0_26, %c0_27], %30 {strides = array<i32>} : memref<8x128xf32, #tpu.memory_space<vmem>>, vector<8x128xf32>,
      %cst_28 = arith.constant 0.000000e+00 : f32
      %32 = vector.broadcast %cst_28 : f32 to vector<8x1xf32>
      %c0_29 = arith.constant 0 : index
      %c0_30 = arith.constant 0 : index
      %33 = vector.load %arg7[%c0_29, %c0_30] : memref<8x1xf32, #tpu.memory_space<vmem>>, vector<8x1xf32>
      tpu.vector_store %arg7[%c0_29, %c0_30], %32 {strides = array<i32>} : memref<8x1xf32, #tpu.memory_space<vmem>>, vector<8x1xf32>,
    } else {
    }
    %c0 = arith.constant 0 : index
    %c0_1 = arith.constant 0 : index
    %3 = vector.load %arg2[%c0, %c0_1] : memref<1x8xi32, #tpu.memory_space<vmem>>, vector<1x8xi32>
    %4 = tpu.iota {dimensions = array<i32: 0>} : vector<8x8xi32>
    %5 = vector.broadcast %3 : vector<1x8xi32> to vector<8x8xi32>
    %6 = arith.cmpi eq, %5, %4 : vector<8x8xi32>
    %cst = arith.constant 1.000000e+00 : f32
    %cst_2 = arith.constant 0.000000e+00 : f32
    %7 = vector.broadcast %cst : f32 to vector<8x8xf32>
    %8 = vector.broadcast %cst_2 : f32 to vector<8x8xf32>
    %9 = arith.select %6, %7, %8 : vector<8x8xi1>, vector<8x8xf32>
    %c0_3 = arith.constant 0 : index
    %c0_4 = arith.constant 0 : index
    %10 = vector.load %arg7[%c0_3, %c0_4] : memref<8x1xf32, #tpu.memory_space<vmem>>, vector<8x1xf32>
    %cst_5 = arith.constant dense<0.000000e+00> : vector<8xf32>
    %11 = vector.multi_reduction <add>, %9, %cst_5 [1] : vector<8x8xf32> to vector<8xf32>
    %12 = vector.shape_cast %11 : vector<8xf32> to vector<8x1xf32>
    %13 = arith.addf %10, %12 : vector<8x1xf32>
    %c0_6 = arith.constant 0 : index
    %c0_7 = arith.constant 0 : index
    %14 = vector.load %arg7[%c0_6, %c0_7] : memref<8x1xf32, #tpu.memory_space<vmem>>, vector<8x1xf32>
    tpu.vector_store %arg7[%c0_6, %c0_7], %13 {strides = array<i32>} : memref<8x1xf32, #tpu.memory_space<vmem>>, vector<8x1xf32>,
    %c0_8 = arith.constant 0 : index
    %c0_9 = arith.constant 0 : index
    %15 = vector.load %arg3[%c0_8, %c0_9] : memref<8x128xf32, #tpu.memory_space<vmem>>, vector<8x128xf32>
    %c0_10 = arith.constant 0 : index
    %c0_11 = arith.constant 0 : index
    %16 = vector.load %arg5[%c0_10, %c0_11] : memref<8x128xf32, #tpu.memory_space<vmem>>, vector<8x128xf32>
    %cst_12 = arith.constant dense<0.000000e+00> : vector<8x128xf32>
    %17 = tpu.matmul %9, %15, %cst_12 {dimension_numbers = #tpu.dot_dimension_numbers<[1], [0], [0], [1], [0, 0, 1, 1], [], []>} : vector<8x8xf32>, vector<8x128xf32>, vector<8x128xf32> -> vector<8x128xf32>
    %18 = arith.addf %16, %17 : vector<8x128xf32>
    %c0_13 = arith.constant 0 : index
    %c0_14 = arith.constant 0 : index
    %19 = vector.load %arg5[%c0_13, %c0_14] : memref<8x128xf32, #tpu.memory_space<vmem>>, vector<8x128xf32>
    tpu.vector_store %arg5[%c0_13, %c0_14], %18 {strides = array<i32>} : memref<8x128xf32, #tpu.memory_space<vmem>>, vector<8x128xf32>,
    %c0_15 = arith.constant 0 : index
    %c0_16 = arith.constant 0 : index
    %20 = vector.load %arg6[%c0_15, %c0_16] : memref<8x128xf32, #tpu.memory_space<vmem>>, vector<8x128xf32>
    %21 = arith.mulf %15, %15 : vector<8x128xf32>
    %cst_17 = arith.constant dense<0.000000e+00> : vector<8x128xf32>
    %22 = tpu.matmul %9, %21, %cst_17 {dimension_numbers = #tpu.dot_dimension_numbers<[1], [0], [0], [1], [0, 0, 1, 1], [], []>} : vector<8x8xf32>, vector<8x128xf32>, vector<8x128xf32> -> vector<8x128xf32>
    %23 = arith.addf %20, %22 : vector<8x128xf32>
    %c0_18 = arith.constant 0 : index
    %c0_19 = arith.constant 0 : index
    %24 = vector.load %arg6[%c0_18, %c0_19] : memref<8x128xf32, #tpu.memory_space<vmem>>, vector<8x128xf32>
    tpu.vector_store %arg6[%c0_18, %c0_19], %23 {strides = array<i32>} : memref<8x128xf32, #tpu.memory_space<vmem>>, vector<8x128xf32>,
    %c0_i32_20 = arith.constant 0 : i32
    %25 = arith.cmpi eq, %arg1, %c0_i32_20 : i32
    %26 = arith.extui %25 : i1 to i32
    %c0_i32_21 = arith.constant 0 : i32
    %27 = arith.cmpi ne, %26, %c0_i32_21 : i32
    scf.if %27 {
      %c0_22 = arith.constant 0 : index
      %c0_23 = arith.constant 0 : index
      %28 = vector.load %arg7[%c0_22, %c0_23] : memref<8x1xf32, #tpu.memory_space<vmem>>, vector<8x1xf32>
      %cst_24 = arith.constant 0.000000e+00 : f32
      %29 = vector.broadcast %cst_24 : f32 to vector<8x1xf32>
      %30 = arith.cmpf oeq, %28, %29 : vector<8x1xf32>
      %cst_25 = arith.constant 1.000000e+00 : f32
      %31 = vector.broadcast %cst_25 : f32 to vector<8x1xf32>
      %32 = arith.select %30, %31, %28 : vector<8x1xi1>, vector<8x1xf32>
      %c0_26 = arith.constant 0 : index
      %c0_27 = arith.constant 0 : index
      %33 = vector.load %arg5[%c0_26, %c0_27] : memref<8x128xf32, #tpu.memory_space<vmem>>, vector<8x128xf32>
      %34 = vector.broadcast %32 : vector<8x1xf32> to vector<8x128xf32>
      %35 = arith.divf %33, %34 : vector<8x128xf32>
      %c0_28 = arith.constant 0 : index
      %c0_29 = arith.constant 0 : index
      %36 = vector.load %arg6[%c0_28, %c0_29] : memref<8x128xf32, #tpu.memory_space<vmem>>, vector<8x128xf32>
      %37 = arith.mulf %35, %33 : vector<8x128xf32>
      %38 = arith.subf %36, %37 : vector<8x128xf32>
      %39 = vector.broadcast %32 : vector<8x1xf32> to vector<8x128xf32>
      %40 = arith.divf %38, %39 : vector<8x128xf32>
      %cst_30 = arith.constant 0.000000e+00 : f32
      %41 = vector.broadcast %cst_30 : f32 to vector<8x128xf32>
      %42 = arith.maximumf %40, %41 : vector<8x128xf32>
      %43 = math.sqrt %42 : vector<8x128xf32>
      %c0_31 = arith.constant 0 : index
      %c0_32 = arith.constant 0 : index
      %44 = vector.load %arg4[%c0_31, %c0_32] : memref<8x128xf32, #tpu.memory_space<vmem>>, vector<8x128xf32>
      tpu.vector_store %arg4[%c0_31, %c0_32], %43 {strides = array<i32>} : memref<8x128xf32, #tpu.memory_space<vmem>>, vector<8x128xf32>,
    } else {
    }
    return
  }
  func.func @transform_0(%arg0: i32, %arg1: i32) -> (i32, i32) {
    %c0_i32 = arith.constant 0 : i32
    %c0_i32_0 = arith.constant 0 : i32
    return %c0_i32, %arg1 : i32, i32
  }
  func.func @transform_1(%arg0: i32, %arg1: i32) -> (i32, i32) {
    %c0_i32 = arith.constant 0 : i32
    return %arg1, %arg0 : i32, i32
  }
  func.func @transform_2(%arg0: i32, %arg1: i32) -> (i32, i32) {
    %c0_i32 = arith.constant 0 : i32
    %c0_i32_0 = arith.constant 0 : i32
    return %c0_i32, %arg0 : i32, i32
  }
}

</mosaic_0001>

<llo_original>
// kernel: tpu_custom_call.1
$region0: #{tpu_custom_call.1}
  #allocation0 [shape = 'u32[]', space=smem, size = 0x4, offset = 0x4, fixed_abs, tag = 'smem constant byte address 0x4 - core index']
  #allocation1 [shape = 'u32[72,128]{1,0:T(1,128)}', space=vmem, size = 0x9000, scoped, tag = 'internal scratch']
  #allocation2 [shape = 'f32[8,128]{1,0:T(8,128)}', space=vmem, size = 0x1000, scoped, tag = 'scratch operand']
  #allocation3 [shape = 'f32[8,128]{1,0:T(8,128)}', space=vmem, size = 0x1000, scoped, tag = 'scratch operand']
  #allocation4 [shape = 'f32[8,1]{1,0:T(8,128)}', space=vmem, size = 0x1000, scoped, tag = 'scratch operand']
  %s0 = inlined_call_operand.hbm [shape: s32[1,8], index: 0, kind: input, shape index: {}]
  %s1 = inlined_call_operand.hbm [shape: f32[8,128], index: 1, kind: input, shape index: {}]
  %s2 = inlined_call_operand.hbm [shape: f32[8,128], index: 2, kind: output, shape index: {}]
  %s3 = sld [smem:[#allocation0]]
  $region34: #{tpu_custom_call.1} parent=0
    _
  %s5 = ssub.s32 1, %s3
  %s6 = scalar_select 0, %s5, %s3
  $region1: #{tpu_custom_call.1} parent=0
    #allocation5 [shape = 'u8[512]{0}', space=vmem, size = 0x400, scoped, tag = 'input window, operand 0, single buffered']
    #allocation6 [shape = 's32[1]{0}', space=sflag, size = 0x4, scoped, tag = 'scoped memory for tpu_custom_call.1']
    #allocation7 [shape = 's32[1]{0}', space=sflag, size = 0x4, scoped, tag = 'scoped memory for tpu_custom_call.1']
    #allocation8 [shape = 'u8[4096]{0}', space=vmem, size = 0x1000, scoped, tag = 'input window, operand 1, single buffered']
    #allocation9 [shape = 's32[1]{0}', space=sflag, size = 0x4, scoped, tag = 'scoped memory for tpu_custom_call.1']
    #allocation10 [shape = 'u8[4096]{0}', space=vmem, size = 0x1000, scoped, tag = 'output window, operand 0, single buffered']
    %7 = vsyncpa [#allocation6], 0
    %8 = vsyncpa [#allocation9], 0
    %9 = vsyncpa [#allocation7], 0
    // Predicated region
    $region2: #{tpu_custom_call.1} parent=1 // pred_check
      _
    $region3: #{tpu_custom_call.1} parent=1 // pred_check_branch
      %11 = sbr.rel (0) target = $region5
    $region4: #{tpu_custom_call.1} parent=1 // pred_region
      %13 = vsyncadd [#allocation6], 0
      %s15 = sshll.u32 %s0, 4
      %s16 = int_to_ptr.hbm [resolvable:$true] %s15
      %s17 = sshll.u32 [#allocation5], 4
      %s18 = int_to_ptr.vmem [resolvable:$true] %s17
      %20 = dma.hbm_to_vmem [thread:$0]  %s16, 16, %s18, [#allocation6]
    $region5: #{tpu_custom_call.1} parent=1 // pred_fallthru
      _
    // Predicated region
    $region6: #{tpu_custom_call.1} parent=1 // pred_check
      _
    $region7: #{tpu_custom_call.1} parent=1 // pred_check_branch
      %22 = sbr.rel (0) target = $region9
    $region8: #{tpu_custom_call.1} parent=1 // pred_region
      %24 = vsyncadd [#allocation9], 0
      %s26 = sshll.u32 %s1, 4
      %s27 = int_to_ptr.hbm [resolvable:$true] %s26
      %s28 = sshll.u32 [#allocation8], 4
      %s29 = int_to_ptr.vmem [resolvable:$true] %s28
      %31 = dma.hbm_to_vmem [thread:$0]  %s27, 128, %s29, [#allocation9]
    $region9: #{tpu_custom_call.1} parent=1 // pred_fallthru
      _
    // Predicated region
    $region10: #{tpu_custom_call.1} parent=1 // pred_check
      _
    $region11: #{tpu_custom_call.1} parent=1 // pred_check_branch
      %33 = sbr.rel (0) target = $region13
    $region12: #{tpu_custom_call.1} parent=1 // pred_region
      %35 = dma.done [#allocation6], 16
    $region13: #{tpu_custom_call.1} parent=1 // pred_fallthru
      _
    // Predicated region
    $region14: #{tpu_custom_call.1} parent=1 // pred_check
      _
    $region15: #{tpu_custom_call.1} parent=1 // pred_check_branch
      %37 = sbr.rel (0) target = $region17
    $region16: #{tpu_custom_call.1} parent=1 // pred_region
      %39 = dma.done [#allocation9], 128
    $region17: #{tpu_custom_call.1} parent=1 // pred_fallthru
      _
    %p40 = scmp.eq.s32.totalorder 0, 0
    // Predicated region
    $region18: #{tpu_custom_call.1} parent=1 // pred_check
      %p41 = pneg %p40
    $region19: #{tpu_custom_call.1} parent=1 // pred_check_branch
      %43 = sbr.rel (%p41) target = $region21
    $region20: #{tpu_custom_call.1} parent=1 // pred_region
      %44 = vst [vmem:[#allocation2] sm:$0xff] 0.0
      %45 = vst [vmem:[#allocation3] sm:$0xff] 0.0
      %vm46 = vcmask 7168
      %47 = vst.msk [vmem:[#allocation4] sm:$0xff] %vm46, 0.0
    $region21: #{tpu_custom_call.1} parent=1 // pred_fallthru
      _
    %v48 = vld [vmem:[#allocation5] sm:$0x1]
    %v49 = vlaneseq
    %v50 = vshrl.u32 %v49, 7
    %v51 = vperm.slane %v48, 0
    %vm52 = vcmp.eq.s32.totalorder %v51, %v50
    %v53 = vsel %vm52, 1.0, 0.0
    %v54 = vld [vmem:[#allocation4] sm:$0xff]
    %vm55 = vcmask 64512
    %v56 = vsel %vm55, %v53, 0.0
    %57 = vadd.xlane.f32.xlu0 %v56
    %v58 = vpop.xlane.xlu0 %57
    %v59 = vadd.f32 %v54, %v58
    %vm60 = vcmask 7168
    %61 = vst.msk [vmem:[#allocation4] sm:$0xff] %vm60, %v59
    %v62 = vld [vmem:[#allocation8] sm:$0xff]
    %v63 = vld [vmem:[#allocation2] sm:$0xff]
    %v65 = vsel %vm55, %v53, 0
    %67 = vmatpush.msra.mxu0 0.0
    %68 = vmatpush.msra.mxu0 0.0
    %69 = vmatpush.msra.mxu0 0.0
    %70 = vmatpush.msra.mxu0 0.0
    %71 = vmatpush.msra.mxu0 0.0
    %72 = vmatpush.msra.mxu0 0.0
    %73 = vmatpush.msra.mxu0 0.0
    %74 = vmatpush.msra.mxu0 0.0
    %75 = vmatpush.msra.mxu0 0.0
    %76 = vmatpush.msra.mxu0 0.0
    %77 = vmatpush.msra.mxu0 0.0
    %78 = vmatpush.msra.mxu0 0.0
    %79 = vmatpush.msra.mxu0 0.0
    %80 = vmatpush.msra.mxu0 0.0
    %81 = vmatpush.msra.mxu0 0.0
    %82 = vmatpush.msra.mxu0 %v62
    %83 = vmatmul.f32.gmra.mxu0 %v65
    %v84 = vpop.f32.mrf.mxu0
    %v85 = vadd.f32 0.0, %v84
    %86 = vdwg.mxu0
    %v87 = vadd.f32 %v63, %v85
    %88 = vst [vmem:[#allocation2] sm:$0xff] %v87
    %v89 = vld [vmem:[#allocation3] sm:$0xff]
    %v90 = vmul.f32 %v62, %v62
    %91 = vmatpush.msra.mxu0 0.0
    %92 = vmatpush.msra.mxu0 0.0
    %93 = vmatpush.msra.mxu0 0.0
    %94 = vmatpush.msra.mxu0 0.0
    %95 = vmatpush.msra.mxu0 0.0
    %96 = vmatpush.msra.mxu0 0.0
    %97 = vmatpush.msra.mxu0 0.0
    %98 = vmatpush.msra.mxu0 0.0
    %99 = vmatpush.msra.mxu0 0.0
    %100 = vmatpush.msra.mxu0 0.0
    %101 = vmatpush.msra.mxu0 0.0
    %102 = vmatpush.msra.mxu0 0.0
    %103 = vmatpush.msra.mxu0 0.0
    %104 = vmatpush.msra.mxu0 0.0
    %105 = vmatpush.msra.mxu0 0.0
    %106 = vmatpush.msra.mxu0 %v90
    %107 = vmatmul.f32.gmra.mxu0 %v65
    %v108 = vpop.f32.mrf.mxu0
    %v109 = vadd.f32 0.0, %v108
    %110 = vdwg.mxu0
    %v111 = vadd.f32 %v89, %v109
    %112 = vst [vmem:[#allocation3] sm:$0xff] %v111
    // Predicated region
    $region22: #{tpu_custom_call.1} parent=1 // pred_check
      %p113 = pneg %p40
    $region23: #{tpu_custom_call.1} parent=1 // pred_check_branch
      %115 = sbr.rel (%p113) target = $region25
    $region24: #{tpu_custom_call.1} parent=1 // pred_region
      %v116 = vld [vmem:[#allocation4] sm:$0xff]
      %vm117 = vcmp.eq.f32.partialorder %v116, 0.0
      %v118 = vsel %vm117, 1.0, %v116
      %v119 = vld [vmem:[#allocation2] sm:$0xff]
      %121 = vset.pattern.permute.xlu0 0
      %122 = vperm.xlu0 %121, %v118
      %v123 = vpop.permute.xlu0 %122
      %v125 = vrcp.pop %v123
      %v126 = vmul.f32 %v123, %v125
      %v127 = vsub.f32 1.0, %v126
      %v128 = vmul.f32 %v125, %v127
      %v129 = vadd.f32 %v125, %v128
      %vm130 = vweird.f32 %v123
      %vm131 = vweird.f32 %v125
      %vm132 = vmor %vm130, %vm131
      %v133 = vsel %vm132, %v125, %v129
      %v134 = vand.u32 2147483647, %v123
      %vm135 = vcmp.eq.f32.partialorder %v134, 8.507059e+37
      %v136 = vand.u32 %v123, 2147483648
      %v137 = vor.u32 1.1754944e-38, %v136
      %v138 = vsel %vm135, %v137, %v133
      %v139 = vmul.f32 %v119, %v138
      %v140 = vld [vmem:[#allocation3] sm:$0xff]
      %v141 = vmul.f32 %v139, %v119
      %v142 = vsub.f32 %v140, %v141
      %v143 = vmul.f32 %v142, %v138
      %v144 = vmax.f32 %v143, 0.0
      %v145 = vrsqrt.pop %v144
      %v146 = vmul.f32 %v145, %v144
      %v147 = vmul.f32 %v146, %v145
      %v148 = vmul.f32 0.5, %v147
      %v149 = vsub.f32 1.5, %v148
      %v150 = vmul.f32 %v145, %v149
      %v151 = vmul.f32 %v144, %v150
      %vm152 = vcmp.eq.f32.partialorder %v144, inf
      %v153 = vsel %vm152, %v144, %v151
      %vm154 = vcmp.eq.f32.partialorder %v144, 0.0
      %v155 = vand.u32 %v144, 2147483648
      %v156 = vsel %vm154, %v155, %v153
      %157 = vst [vmem:[#allocation10] sm:$0xff] %v156
    $region25: #{tpu_custom_call.1} parent=1 // pred_fallthru
      _
    // Predicated region
    $region26: #{tpu_custom_call.1} parent=1 // pred_check
      _
    $region27: #{tpu_custom_call.1} parent=1 // pred_check_branch
      %159 = sbr.rel (0) target = $region29
    $region28: #{tpu_custom_call.1} parent=1 // pred_region
      %161 = vsyncadd [#allocation7], 0
      %s163 = sshll.u32 [#allocation10], 4
      %s164 = int_to_ptr.vmem [resolvable:$true] %s163
      %s165 = sshll.u32 %s2, 4
      %s166 = int_to_ptr.hbm [resolvable:$true] %s165
      %168 = dma.vmem_to_hbm [thread:$0]  %s164, 128, %s166, [#allocation7]
    $region29: #{tpu_custom_call.1} parent=1 // pred_fallthru
      _
    // Predicated region
    $region30: #{tpu_custom_call.1} parent=1 // pred_check
      _
    $region31: #{tpu_custom_call.1} parent=1 // pred_check_branch
      %170 = sbr.rel (0) target = $region33
    $region32: #{tpu_custom_call.1} parent=1 // pred_region
      %172 = dma.done [#allocation7], 128
    $region33: #{tpu_custom_call.1} parent=1 // pred_fallthru
      _
    %173 = vsyncpa [#allocation6], 1
    %174 = vsyncpa [#allocation9], 1
    %175 = vsyncpa [#allocation7], 1

</llo_original>
